<compile_context>
chip_gen: v6e
topology: v6e:2x2x1
jax: 0.10.0
libtpu: 0.0.40
codegen_flags: <defaults>
</compile_context>

<pallas_src>
import math

import jax
import jax.numpy as jnp
import numpy as np
from jax.experimental import pallas as pl
from jax.experimental.pallas import tpu as pltpu


# ----------------------------------------------------------------------------
# helpers
# ----------------------------------------------------------------------------
def _round_up(x, m):
    return ((x + m - 1) // m) * m


def _halo_offset(pmax):
    # place the L data columns at a 128-aligned lane offset inside the scratch
    return _round_up(pmax, 128) if pmax > 0 else 0


def _block_vmem_bytes(shape, itemsize):
    """Rough VMEM footprint of a block, accounting for (sublane, lane) padding."""
    s = list(shape)
    s[-1] = _round_up(s[-1], 128)
    if len(s) >= 2:
        sub = {4: 8, 2: 16, 1: 32}.get(itemsize, 8)
        s[-2] = _round_up(s[-2], sub)
    n = 1
    for v in s:
        n *= v
    return n * itemsize


def _estimate_chunk_vmem_bytes(meta, L):
    pmax = max(m["p"] for m in meta)
    doff = _halo_offset(pmax)
    cin0, cout_last = meta[0]["cin"], meta[-1]["cout"]
    cmax_in = max(m["cin"] for m in meta)
    cmax_out = max(m["cout"] for m in meta)
    total = 2 * _block_vmem_bytes((cin0, L), 4)           # input block (double-buffered)
    total += 2 * _block_vmem_bytes((cout_last, L), 4)     # output block (double-buffered)
    total += _block_vmem_bytes((cmax_in, doff + L), 4)    # padded-input scratch
    total += _block_vmem_bytes((cmax_out, doff + L), 4)   # padded-hidden scratch
    for m in meta:
        k, ci, co = m["k"], m["cin"], m["cout"]
        total += 2 * (_block_vmem_bytes((k, co, ci), 2)
                      + _block_vmem_bytes((k, co, co), 2)
                      + _block_vmem_bytes((co, 3), 4))
        if m["has_down"]:
            total += 2 * _block_vmem_bytes((co, ci), 2)
    # slack for live f32 intermediates (act / h / h2)
    total += 4 * _block_vmem_bytes((cmax_out, L), 4)
    return total


# ----------------------------------------------------------------------------
# fused multi-block kernel
# ----------------------------------------------------------------------------
def _make_fused_tcn_kernel(layer_meta, L, doff):
    """Kernel fusing a contiguous run of TemporalBlocks for one batch element."""
    n_layer_refs = sum(4 if m["has_down"] else 3 for m in layer_meta)

    def kernel(*refs):
        x_ref = refs[0]
        out_ref = refs[1 + n_layer_refs]
        buf_a = refs[2 + n_layer_refs]     # padded layer-input scratch (f32)
        buf_b = refs[3 + n_layer_refs]     # padded conv1-output scratch (f32)

        # Zero the causal halo columns once; data stores never touch them, so the
        # left zero-padding is available to every fused layer "for free".
        if doff > 0:
            buf_a[:, :doff] = jnp.zeros((buf_a.shape[0], doff), buf_a.dtype)
            buf_b[:, :doff] = jnp.zeros((buf_b.shape[0], doff), buf_b.dtype)

        act = x_ref[0]                                    # (Cin0, L) float32
        pos = 1
        for m in layer_meta:
            cin, cout = m["cin"], m["cout"]
            k, d, p = m["k"], m["d"], m["p"]
            w1_ref, w2_ref, b_ref = refs[pos], refs[pos + 1], refs[pos + 2]
            pos += 3
            if m["has_down"]:
                wd_ref = refs[pos]
                pos += 1

            s0 = doff - p   # window start of tap 0 (>= 0, lands in the zero halo)

            # ---- conv1 (weight_norm + BN folded into w1 / bias) + ReLU ------
            buf_a[:cin, doff:doff + L] = act
            xpad = buf_a[:cin, :].astype(jnp.bfloat16)    # (cin, doff + L)
            h = jnp.dot(w1_ref[0], xpad[:, s0:s0 + L],
                        preferred_element_type=jnp.float32)
            for j in range(1, k):
                h = h + jnp.dot(w1_ref[j], xpad[:, s0 + j * d:s0 + j * d + L],
                                preferred_element_type=jnp.float32)
            h = jnp.maximum(h + b_ref[:, 0:1], 0.0)       # Dropout == identity (eval)

            # ---- conv2 (weight_norm + BN folded) + ReLU ---------------------
            buf_b[:cout, doff:doff + L] = h
            hpad = buf_b[:cout, :].astype(jnp.bfloat16)
            h2 = jnp.dot(w2_ref[0], hpad[:, s0:s0 + L],
                         preferred_element_type=jnp.float32)
            for j in range(1, k):
                h2 = h2 + jnp.dot(w2_ref[j], hpad[:, s0 + j * d:s0 + j * d + L],
                                  preferred_element_type=jnp.float32)
            h2 = jnp.maximum(h2 + b_ref[:, 1:2], 0.0)

            # ---- residual + final ReLU (kept in f32) ------------------------
            if m["has_down"]:
                res = jnp.dot(wd_ref[...], xpad[:, doff:doff + L],
                              preferred_element_type=jnp.float32) + b_ref[:, 2:3]
            else:
                res = act
            act = jnp.maximum(h2 + res, 0.0)

        out_ref[0] = act.astype(out_ref.dtype)

    return kernel


def _fold_layer_params(params):
    """Fold BatchNorm (eval) into the conv weights / biases; pack per-channel
    biases into one operand; cast matmul operands to bf16."""
    w1, b1, s1, t1 = params["w1"], params["b1"], params["s1"], params["t1"]
    w2, b2, s2, t2 = params["w2"], params["b2"], params["s2"], params["t2"]
    w1f = (w1 * s1[None, :, :]).astype(jnp.bfloat16)      # (k, Cout, Cin)
    w2f = (w2 * s2[None, :, :]).astype(jnp.bfloat16)      # (k, Cout, Cout)
    b1f = s1 * b1 + t1
    b2f = s2 * b2 + t2
    if "wd" in params:
        bvec = jnp.concatenate([b1f, b2f, params["bd"]], axis=1)   # (Cout, 3)
        return dict(w1=w1f, w2=w2f, b=bvec, wd=params["wd"].astype(jnp.bfloat16))
    return dict(w1=w1f, w2=w2f, b=jnp.concatenate([b1f, b2f], axis=1))


def _fused_chunk_forward(x, folded, meta):
    """Run a contiguous chunk of TemporalBlocks as one pallas_call."""
    B, c_in0, L = x.shape
    c_out_last = meta[-1]["cout"]
    pmax = max(m["p"] for m in meta)
    doff = _halo_offset(pmax)
    cmax_in = max(m["cin"] for m in meta)
    cmax_out = max(m["cout"] for m in meta)

    inputs = [x]
    in_specs = [pl.BlockSpec((1, c_in0, L), lambda b: (b, 0, 0))]
    for fp, m in zip(folded, meta):
        k, cin, cout = m["k"], m["cin"], m["cout"]
        inputs += [fp["w1"], fp["w2"], fp["b"]]
        in_specs += [
            pl.BlockSpec((k, cout, cin), lambda b: (0, 0, 0)),
            pl.BlockSpec((k, cout, cout), lambda b: (0, 0, 0)),
            pl.BlockSpec(fp["b"].shape, lambda b: (0, 0)),
        ]
        if m["has_down"]:
            inputs.append(fp["wd"])
            in_specs.append(pl.BlockSpec((cout, cin), lambda b: (0, 0)))

    scratch_shapes = [
        pltpu.VMEM((cmax_in, doff + L), jnp.float32),
        pltpu.VMEM((cmax_out, doff + L), jnp.float32),
    ]

    est = _estimate_chunk_vmem_bytes(meta, L)
    cp_kwargs = dict(dimension_semantics=("parallel",))
    if est > 28 * 1024 * 1024:   # only when exceeding the default scoped limit
        cp_kwargs["vmem_limit_bytes"] = int(min(100 * 1024 * 1024, 2 * est))

    return pl.pallas_call(
        _make_fused_tcn_kernel(tuple(meta), L, doff),
        out_shape=jax.ShapeDtypeStruct((B, c_out_last, L), jnp.float32),
        grid=(B,),
        in_specs=in_specs,
        out_specs=pl.BlockSpec((1, c_out_last, L), lambda b: (b, 0, 0)),
        scratch_shapes=scratch_shapes,
        compiler_params=pltpu.CompilerParams(**cp_kwargs),
    )(*inputs)


_VMEM_BUDGET_BYTES = 20 * 1024 * 1024   # conservative for v7x (64 MiB VMEM)


def temporal_conv_net_forward(x, layer_params, kernel_size=2, reverse=False,
                              vmem_budget_bytes=_VMEM_BUDGET_BYTES):
    """x: (B, Cin, L) float32 -> (B, Cout_last, L) float32."""
    num_levels = len(layer_params)
    _, c_in, L = x.shape

    meta = []
    for i, params in enumerate(layer_params):
        d = int(2 ** (num_levels - 1) / 2 ** i) if reverse else 2 ** i
        c_out = params["w1"].shape[1]
        meta.append(dict(cin=c_in, cout=c_out, k=kernel_size, d=d,
                         p=(kernel_size - 1) * d, has_down="wd" in params))
        c_in = c_out

    folded = [_fold_layer_params(p) for p in layer_params]

    # Greedy layer fusion: fuse as many consecutive blocks as fit the VMEM budget.
    i = 0
    while i < num_levels:
        j = i + 1
        while (j < num_levels
               and _estimate_chunk_vmem_bytes(meta[i:j + 1], L) <= vmem_budget_bytes):
            j += 1
        # TODO(synk): if a single block alone exceeds the budget, an L-tiled grid
        #             with a causal halo would be needed; it runs as one slab here.
        x = _fused_chunk_forward(x, folded[i:j], meta[i:j])
        i = j
    return x


# ----------------------------------------------------------------------------
# Deterministic parameter initialization (mirrors the PyTorch __init__)
# ----------------------------------------------------------------------------
def _weight_norm_fold(v):
    # weight_norm(dim=0): w = g * v / ||v||, with g initialized to ||v|| -> w == v.
    g = jnp.sqrt(jnp.sum(v * v, axis=tuple(range(1, v.ndim)), keepdims=True))
    return g * v / jnp.maximum(g, 1e-12)


def _bn_fold(c, eps=1e-5):
    gamma = jnp.ones((c,), jnp.float32)
    beta = jnp.zeros((c,), jnp.float32)
    mean = jnp.zeros((c,), jnp.float32)
    var = jnp.ones((c,), jnp.float32)
    scale = gamma * jax.lax.rsqrt(var + eps)
    shift = beta - mean * scale
    return scale.reshape(c, 1), shift.reshape(c, 1)


def init_tcn_params(key, num_inputs, num_channels, kernel_size):
    layers = []
    c_in = num_inputs
    for c_out in num_channels:
        key, k1, k2, k3, k4, k5, k6 = jax.random.split(key, 7)
        # conv1 (weight_norm), weight ~ N(0, 0.01); bias: PyTorch default uniform
        v1 = 0.01 * jax.random.normal(k1, (c_out, c_in, kernel_size), jnp.float32)
        w1 = jnp.transpose(_weight_norm_fold(v1), (2, 0, 1))         # (k, Cout, Cin)
        bnd1 = 1.0 / math.sqrt(c_in * kernel_size)
        b1 = jax.random.uniform(k2, (c_out, 1), jnp.float32, -bnd1, bnd1)
        s1, t1 = _bn_fold(c_out)
        # conv2
        v2 = 0.01 * jax.random.normal(k3, (c_out, c_out, kernel_size), jnp.float32)
        w2 = jnp.transpose(_weight_norm_fold(v2), (2, 0, 1))         # (k, Cout, Cout)
        bnd2 = 1.0 / math.sqrt(c_out * kernel_size)
        b2 = jax.random.uniform(k4, (c_out, 1), jnp.float32, -bnd2, bnd2)
        s2, t2 = _bn_fold(c_out)
        params = dict(w1=w1, b1=b1, s1=s1, t1=t1, w2=w2, b2=b2, s2=s2, t2=t2)
        # downsample 1x1 conv if channel counts differ
        if c_in != c_out:
            wd = 0.01 * jax.random.normal(k5, (c_out, c_in), jnp.float32)
            bndd = 1.0 / math.sqrt(c_in)
            bd = jax.random.uniform(k6, (c_out, 1), jnp.float32, -bndd, bndd)
            params["wd"] = wd
            params["bd"] = bd
        layers.append(params)
        c_in = c_out
    return layers


# ----------------------------------------------------------------------------
# Pure-JAX reference (lax.conv) for correctness checking
# ----------------------------------------------------------------------------
def _ref_block(x, params, k, d, p):
    def causal_conv(inp, w_koc, b):
        w = jnp.transpose(w_koc, (1, 2, 0))                          # (O, I, k)
        y = jax.lax.conv_general_dilated(
            inp, w, window_strides=(1,), padding=[(p, p)], rhs_dilation=(d,),
            dimension_numbers=("NCH", "OIH", "NCH"),
            precision=jax.lax.Precision.HIGHEST)
        y = y[:, :, :inp.shape[2]]                                   # Chomp1d(p)
        return y + b[None, :, :]

    h = jnp.maximum(causal_conv(x, params["w1"], params["b1"]) * params["s1"][None]
                    + params["t1"][None], 0.0)
    h2 = jnp.maximum(causal_conv(h, params["w2"], params["b2"]) * params["s2"][None]
                     + params["t2"][None], 0.0)
    if "wd" in params:
        res = jnp.einsum("oc,bct->bot", params["wd"], x,
                         precision=jax.lax.Precision.HIGHEST) + params["bd"][None]
    else:
        res = x
    return jnp.maximum(h2 + res, 0.0)


def _ref_tcn(x, layer_params, kernel_size=2, reverse=False):
    num_levels = len(layer_params)
    for i, params in enumerate(layer_params):
        d = int(2 ** (num_levels - 1) / 2 ** i) if reverse else 2 ** i
        p = (kernel_size - 1) * d
        x = _ref_block(x, params, kernel_size, d, p)
    return x


# ----------------------------------------------------------------------------
if __name__ == "__main__":
    # Small shapes consistent with TemporalConvNet.forward: x is (Batch, C_in, seq_len)
    B, num_inputs, L = 2, 4, 16
    num_channels = [8, 8]          # 2 temporal blocks; first has a downsample conv
    kernel_size = 2

    key = jax.random.PRNGKey(0)
    key, xkey = jax.random.split(key)
    x = jax.random.normal(xkey, (B, num_inputs, L), jnp.float32)

    layer_params = init_tcn_params(key, num_inputs, num_channels, kernel_size)

    out = temporal_conv_net_forward(x, layer_params, kernel_size=kernel_size)
    out = jax.block_until_ready(out)

    ref = jax.block_until_ready(_ref_tcn(x, layer_params, kernel_size=kernel_size))
    if out.shape != (B, num_channels[-1], L):
        raise AssertionError(f"bad output shape {out.shape}")
    # bf16 MXU operands (f32 accumulation) -> slightly looser tolerance than pure f32
    if not np.allclose(np.asarray(out), np.asarray(ref), atol=5e-3, rtol=3e-2):
        raise AssertionError("Pallas TCN output mismatch vs pure-JAX reference")

    print("KERNEL_OK")
</pallas_src>

<mosaic_0001>
module attributes {stable_mosaic.version = 11 : i64} {
  func.func @kernel(%arg0: i32, %arg1: memref<1x4x16xf32, #tpu.memory_space<vmem>>, %arg2: memref<2x8x4xbf16, #tpu.memory_space<vmem>>, %arg3: memref<2x8x8xbf16, #tpu.memory_space<vmem>>, %arg4: memref<8x3xf32, #tpu.memory_space<vmem>>, %arg5: memref<8x4xbf16, #tpu.memory_space<vmem>>, %arg6: memref<2x8x8xbf16, #tpu.memory_space<vmem>>, %arg7: memref<2x8x8xbf16, #tpu.memory_space<vmem>>, %arg8: memref<8x2xf32, #tpu.memory_space<vmem>>, %arg9: memref<1x8x16xf32, #tpu.memory_space<vmem>>, %arg10: memref<8x144xf32, #tpu.memory_space<vmem>>, %arg11: memref<8x144xf32, #tpu.memory_space<vmem>>) attributes {dimension_semantics = [#tpu.dimension_semantics<parallel>], iteration_bounds = array<i64: 2>, scalar_prefetch = 0 : i64, scratch_operands = 2 : i64, tpu.core_type = #tpu.core_type<tc>, window_params = [{transform_indices = @transform_0, window_bounds = array<i64: 1, 4, 16>}, {pipeline_mode = #tpu.pipeline_mode<synchronous>, transform_indices = @transform_1, window_bounds = array<i64: 2, 8, 4>}, {pipeline_mode = #tpu.pipeline_mode<synchronous>, transform_indices = @transform_2, window_bounds = array<i64: 2, 8, 8>}, {pipeline_mode = #tpu.pipeline_mode<synchronous>, transform_indices = @transform_3, window_bounds = array<i64: 8, 3>}, {pipeline_mode = #tpu.pipeline_mode<synchronous>, transform_indices = @transform_4, window_bounds = array<i64: 8, 4>}, {pipeline_mode = #tpu.pipeline_mode<synchronous>, transform_indices = @transform_5, window_bounds = array<i64: 2, 8, 8>}, {pipeline_mode = #tpu.pipeline_mode<synchronous>, transform_indices = @transform_6, window_bounds = array<i64: 2, 8, 8>}, {pipeline_mode = #tpu.pipeline_mode<synchronous>, transform_indices = @transform_7, window_bounds = array<i64: 8, 2>}, {transform_indices = @transform_8, window_bounds = array<i64: 1, 8, 16>}]} {
    %cst = arith.constant 0.000000e+00 : f32
    %0 = vector.broadcast %cst : f32 to vector<8x128xf32>
    %c0 = arith.constant 0 : index
    %c0_0 = arith.constant 0 : index
    %1 = vector.load %arg10[%c0, %c0_0] : memref<8x144xf32, #tpu.memory_space<vmem>>, vector<8x128xf32>
    tpu.vector_store %arg10[%c0, %c0_0], %0 {strides = array<i32>} : memref<8x144xf32, #tpu.memory_space<vmem>>, vector<8x128xf32>,
    %cst_1 = arith.constant 0.000000e+00 : f32
    %2 = vector.broadcast %cst_1 : f32 to vector<8x128xf32>
    %c0_2 = arith.constant 0 : index
    %c0_3 = arith.constant 0 : index
    %3 = vector.load %arg11[%c0_2, %c0_3] : memref<8x144xf32, #tpu.memory_space<vmem>>, vector<8x128xf32>
    tpu.vector_store %arg11[%c0_2, %c0_3], %2 {strides = array<i32>} : memref<8x144xf32, #tpu.memory_space<vmem>>, vector<8x128xf32>,
    %c0_4 = arith.constant 0 : index
    %c0_5 = arith.constant 0 : index
    %c0_6 = arith.constant 0 : index
    %4 = vector.load %arg1[%c0_4, %c0_5, %c0_6] : memref<1x4x16xf32, #tpu.memory_space<vmem>>, vector<1x4x16xf32>
    %5 = vector.shape_cast %4 : vector<1x4x16xf32> to vector<4x16xf32>
    %c0_7 = arith.constant 0 : index
    %c128 = arith.constant 128 : index
    %6 = vector.load %arg10[%c0_7, %c128] : memref<8x144xf32, #tpu.memory_space<vmem>>, vector<4x16xf32>
    tpu.vector_store %arg10[%c0_7, %c128], %5 {strides = array<i32>} : memref<8x144xf32, #tpu.memory_space<vmem>>, vector<4x16xf32>,
    %c0_8 = arith.constant 0 : index
    %c0_9 = arith.constant 0 : index
    %7 = vector.load %arg10[%c0_8, %c0_9] : memref<8x144xf32, #tpu.memory_space<vmem>>, vector<4x144xf32>
    %8 = arith.truncf %7 : vector<4x144xf32> to vector<4x144xbf16>
    %c0_10 = arith.constant 0 : index
    %c0_11 = arith.constant 0 : index
    %c0_12 = arith.constant 0 : index
    %9 = vector.load %arg2[%c0_10, %c0_11, %c0_12] : memref<2x8x4xbf16, #tpu.memory_space<vmem>>, vector<1x8x4xbf16>
    %10 = vector.shape_cast %9 : vector<1x8x4xbf16> to vector<8x4xbf16>
    %11 = vector.extract_strided_slice %8 {offsets = [0, 127], sizes = [4, 16], strides = [1, 1]} : vector<4x144xbf16> to vector<4x16xbf16>
    %cst_13 = arith.constant dense<0.000000e+00> : vector<8x16xf32>
    %12 = tpu.matmul %10, %11, %cst_13 {dimension_numbers = #tpu.dot_dimension_numbers<[1], [0], [0], [1], [0, 0, 1, 1], [], []>} : vector<8x4xbf16>, vector<4x16xbf16>, vector<8x16xf32> -> vector<8x16xf32>
    %c1 = arith.constant 1 : index
    %c0_14 = arith.constant 0 : index
    %c0_15 = arith.constant 0 : index
    %13 = vector.load %arg2[%c1, %c0_14, %c0_15] : memref<2x8x4xbf16, #tpu.memory_space<vmem>>, vector<1x8x4xbf16>
    %14 = vector.shape_cast %13 : vector<1x8x4xbf16> to vector<8x4xbf16>
    %15 = vector.extract_strided_slice %8 {offsets = [0, 128], sizes = [4, 16], strides = [1, 1]} : vector<4x144xbf16> to vector<4x16xbf16>
    %cst_16 = arith.constant dense<0.000000e+00> : vector<8x16xf32>
    %16 = tpu.matmul %14, %15, %cst_16 {dimension_numbers = #tpu.dot_dimension_numbers<[1], [0], [0], [1], [0, 0, 1, 1], [], []>} : vector<8x4xbf16>, vector<4x16xbf16>, vector<8x16xf32> -> vector<8x16xf32>
    %17 = arith.addf %12, %16 : vector<8x16xf32>
    %c0_17 = arith.constant 0 : index
    %c0_18 = arith.constant 0 : index
    %18 = vector.load %arg4[%c0_17, %c0_18] : memref<8x3xf32, #tpu.memory_space<vmem>>, vector<8x1xf32>
    %19 = vector.broadcast %18 : vector<8x1xf32> to vector<8x16xf32>
    %20 = arith.addf %17, %19 : vector<8x16xf32>
    %cst_19 = arith.constant 0.000000e+00 : f32
    %21 = vector.broadcast %cst_19 : f32 to vector<8x16xf32>
    %22 = arith.maximumf %20, %21 : vector<8x16xf32>
    %c0_20 = arith.constant 0 : index
    %c128_21 = arith.constant 128 : index
    %23 = vector.load %arg11[%c0_20, %c128_21] : memref<8x144xf32, #tpu.memory_space<vmem>>, vector<8x16xf32>
    tpu.vector_store %arg11[%c0_20, %c128_21], %22 {strides = array<i32>} : memref<8x144xf32, #tpu.memory_space<vmem>>, vector<8x16xf32>,
    %c0_22 = arith.constant 0 : index
    %c0_23 = arith.constant 0 : index
    %24 = vector.load %arg11[%c0_22, %c0_23] : memref<8x144xf32, #tpu.memory_space<vmem>>, vector<8x144xf32>
    %25 = arith.truncf %24 : vector<8x144xf32> to vector<8x144xbf16>
    %c0_24 = arith.constant 0 : index
    %c0_25 = arith.constant 0 : index
    %c0_26 = arith.constant 0 : index
    %26 = vector.load %arg3[%c0_24, %c0_25, %c0_26] : memref<2x8x8xbf16, #tpu.memory_space<vmem>>, vector<1x8x8xbf16>
    %27 = vector.shape_cast %26 : vector<1x8x8xbf16> to vector<8x8xbf16>
    %28 = vector.extract_strided_slice %25 {offsets = [0, 127], sizes = [8, 16], strides = [1, 1]} : vector<8x144xbf16> to vector<8x16xbf16>
    %cst_27 = arith.constant dense<0.000000e+00> : vector<8x16xf32>
    %29 = tpu.matmul %27, %28, %cst_27 {dimension_numbers = #tpu.dot_dimension_numbers<[1], [0], [0], [1], [0, 0, 1, 1], [], []>} : vector<8x8xbf16>, vector<8x16xbf16>, vector<8x16xf32> -> vector<8x16xf32>
    %c1_28 = arith.constant 1 : index
    %c0_29 = arith.constant 0 : index
    %c0_30 = arith.constant 0 : index
    %30 = vector.load %arg3[%c1_28, %c0_29, %c0_30] : memref<2x8x8xbf16, #tpu.memory_space<vmem>>, vector<1x8x8xbf16>
    %31 = vector.shape_cast %30 : vector<1x8x8xbf16> to vector<8x8xbf16>
    %32 = vector.extract_strided_slice %25 {offsets = [0, 128], sizes = [8, 16], strides = [1, 1]} : vector<8x144xbf16> to vector<8x16xbf16>
    %cst_31 = arith.constant dense<0.000000e+00> : vector<8x16xf32>
    %33 = tpu.matmul %31, %32, %cst_31 {dimension_numbers = #tpu.dot_dimension_numbers<[1], [0], [0], [1], [0, 0, 1, 1], [], []>} : vector<8x8xbf16>, vector<8x16xbf16>, vector<8x16xf32> -> vector<8x16xf32>
    %34 = arith.addf %29, %33 : vector<8x16xf32>
    %c0_32 = arith.constant 0 : index
    %c1_33 = arith.constant 1 : index
    %35 = vector.load %arg4[%c0_32, %c1_33] : memref<8x3xf32, #tpu.memory_space<vmem>>, vector<8x1xf32>
    %36 = vector.broadcast %35 : vector<8x1xf32> to vector<8x16xf32>
    %37 = arith.addf %34, %36 : vector<8x16xf32>
    %cst_34 = arith.constant 0.000000e+00 : f32
    %38 = vector.broadcast %cst_34 : f32 to vector<8x16xf32>
    %39 = arith.maximumf %37, %38 : vector<8x16xf32>
    %c0_35 = arith.constant 0 : index
    %c0_36 = arith.constant 0 : index
    %40 = vector.load %arg5[%c0_35, %c0_36] : memref<8x4xbf16, #tpu.memory_space<vmem>>, vector<8x4xbf16>
    %41 = vector.extract_strided_slice %8 {offsets = [0, 128], sizes = [4, 16], strides = [1, 1]} : vector<4x144xbf16> to vector<4x16xbf16>
    %cst_37 = arith.constant dense<0.000000e+00> : vector<8x16xf32>
    %42 = tpu.matmul %40, %41, %cst_37 {dimension_numbers = #tpu.dot_dimension_numbers<[1], [0], [0], [1], [0, 0, 1, 1], [], []>} : vector<8x4xbf16>, vector<4x16xbf16>, vector<8x16xf32> -> vector<8x16xf32>
    %c0_38 = arith.constant 0 : index
    %c2 = arith.constant 2 : index
    %43 = vector.load %arg4[%c0_38, %c2] : memref<8x3xf32, #tpu.memory_space<vmem>>, vector<8x1xf32>
    %44 = vector.broadcast %43 : vector<8x1xf32> to vector<8x16xf32>
    %45 = arith.addf %42, %44 : vector<8x16xf32>
    %46 = arith.addf %39, %45 : vector<8x16xf32>
    %cst_39 = arith.constant 0.000000e+00 : f32
    %47 = vector.broadcast %cst_39 : f32 to vector<8x16xf32>
    %48 = arith.maximumf %46, %47 : vector<8x16xf32>
    %c0_40 = arith.constant 0 : index
    %c128_41 = arith.constant 128 : index
    %49 = vector.load %arg10[%c0_40, %c128_41] : memref<8x144xf32, #tpu.memory_space<vmem>>, vector<8x16xf32>
    tpu.vector_store %arg10[%c0_40, %c128_41], %48 {strides = array<i32>} : memref<8x144xf32, #tpu.memory_space<vmem>>, vector<8x16xf32>,
    %c0_42 = arith.constant 0 : index
    %c0_43 = arith.constant 0 : index
    %50 = vector.load %arg10[%c0_42, %c0_43] : memref<8x144xf32, #tpu.memory_space<vmem>>, vector<8x144xf32>
    %51 = arith.truncf %50 : vector<8x144xf32> to vector<8x144xbf16>
    %c0_44 = arith.constant 0 : index
    %c0_45 = arith.constant 0 : index
    %c0_46 = arith.constant 0 : index
    %52 = vector.load %arg6[%c0_44, %c0_45, %c0_46] : memref<2x8x8xbf16, #tpu.memory_space<vmem>>, vector<1x8x8xbf16>
    %53 = vector.shape_cast %52 : vector<1x8x8xbf16> to vector<8x8xbf16>
    %54 = vector.extract_strided_slice %51 {offsets = [0, 126], sizes = [8, 16], strides = [1, 1]} : vector<8x144xbf16> to vector<8x16xbf16>
    %cst_47 = arith.constant dense<0.000000e+00> : vector<8x16xf32>
    %55 = tpu.matmul %53, %54, %cst_47 {dimension_numbers = #tpu.dot_dimension_numbers<[1], [0], [0], [1], [0, 0, 1, 1], [], []>} : vector<8x8xbf16>, vector<8x16xbf16>, vector<8x16xf32> -> vector<8x16xf32>
    %c1_48 = arith.constant 1 : index
    %c0_49 = arith.constant 0 : index
    %c0_50 = arith.constant 0 : index
    %56 = vector.load %arg6[%c1_48, %c0_49, %c0_50] : memref<2x8x8xbf16, #tpu.memory_space<vmem>>, vector<1x8x8xbf16>
    %57 = vector.shape_cast %56 : vector<1x8x8xbf16> to vector<8x8xbf16>
    %58 = vector.extract_strided_slice %51 {offsets = [0, 128], sizes = [8, 16], strides = [1, 1]} : vector<8x144xbf16> to vector<8x16xbf16>
    %cst_51 = arith.constant dense<0.000000e+00> : vector<8x16xf32>
    %59 = tpu.matmul %57, %58, %cst_51 {dimension_numbers = #tpu.dot_dimension_numbers<[1], [0], [0], [1], [0, 0, 1, 1], [], []>} : vector<8x8xbf16>, vector<8x16xbf16>, vector<8x16xf32> -> vector<8x16xf32>
    %60 = arith.addf %55, %59 : vector<8x16xf32>
    %c0_52 = arith.constant 0 : index
    %c0_53 = arith.constant 0 : index
    %61 = vector.load %arg8[%c0_52, %c0_53] : memref<8x2xf32, #tpu.memory_space<vmem>>, vector<8x1xf32>
    %62 = vector.broadcast %61 : vector<8x1xf32> to vector<8x16xf32>
    %63 = arith.addf %60, %62 : vector<8x16xf32>
    %cst_54 = arith.constant 0.000000e+00 : f32
    %64 = vector.broadcast %cst_54 : f32 to vector<8x16xf32>
    %65 = arith.maximumf %63, %64 : vector<8x16xf32>
    %c0_55 = arith.constant 0 : index
    %c128_56 = arith.constant 128 : index
    %66 = vector.load %arg11[%c0_55, %c128_56] : memref<8x144xf32, #tpu.memory_space<vmem>>, vector<8x16xf32>
    tpu.vector_store %arg11[%c0_55, %c128_56], %65 {strides = array<i32>} : memref<8x144xf32, #tpu.memory_space<vmem>>, vector<8x16xf32>,
    %c0_57 = arith.constant 0 : index
    %c0_58 = arith.constant 0 : index
    %67 = vector.load %arg11[%c0_57, %c0_58] : memref<8x144xf32, #tpu.memory_space<vmem>>, vector<8x144xf32>
    %68 = arith.truncf %67 : vector<8x144xf32> to vector<8x144xbf16>
    %c0_59 = arith.constant 0 : index
    %c0_60 = arith.constant 0 : index
    %c0_61 = arith.constant 0 : index
    %69 = vector.load %arg7[%c0_59, %c0_60, %c0_61] : memref<2x8x8xbf16, #tpu.memory_space<vmem>>, vector<1x8x8xbf16>
    %70 = vector.shape_cast %69 : vector<1x8x8xbf16> to vector<8x8xbf16>
    %71 = vector.extract_strided_slice %68 {offsets = [0, 126], sizes = [8, 16], strides = [1, 1]} : vector<8x144xbf16> to vector<8x16xbf16>
    %cst_62 = arith.constant dense<0.000000e+00> : vector<8x16xf32>
    %72 = tpu.matmul %70, %71, %cst_62 {dimension_numbers = #tpu.dot_dimension_numbers<[1], [0], [0], [1], [0, 0, 1, 1], [], []>} : vector<8x8xbf16>, vector<8x16xbf16>, vector<8x16xf32> -> vector<8x16xf32>
    %c1_63 = arith.constant 1 : index
    %c0_64 = arith.constant 0 : index
    %c0_65 = arith.constant 0 : index
    %73 = vector.load %arg7[%c1_63, %c0_64, %c0_65] : memref<2x8x8xbf16, #tpu.memory_space<vmem>>, vector<1x8x8xbf16>
    %74 = vector.shape_cast %73 : vector<1x8x8xbf16> to vector<8x8xbf16>
    %75 = vector.extract_strided_slice %68 {offsets = [0, 128], sizes = [8, 16], strides = [1, 1]} : vector<8x144xbf16> to vector<8x16xbf16>
    %cst_66 = arith.constant dense<0.000000e+00> : vector<8x16xf32>
    %76 = tpu.matmul %74, %75, %cst_66 {dimension_numbers = #tpu.dot_dimension_numbers<[1], [0], [0], [1], [0, 0, 1, 1], [], []>} : vector<8x8xbf16>, vector<8x16xbf16>, vector<8x16xf32> -> vector<8x16xf32>
    %77 = arith.addf %72, %76 : vector<8x16xf32>
    %c0_67 = arith.constant 0 : index
    %c1_68 = arith.constant 1 : index
    %78 = vector.load %arg8[%c0_67, %c1_68] : memref<8x2xf32, #tpu.memory_space<vmem>>, vector<8x1xf32>
    %79 = vector.broadcast %78 : vector<8x1xf32> to vector<8x16xf32>
    %80 = arith.addf %77, %79 : vector<8x16xf32>
    %cst_69 = arith.constant 0.000000e+00 : f32
    %81 = vector.broadcast %cst_69 : f32 to vector<8x16xf32>
    %82 = arith.maximumf %80, %81 : vector<8x16xf32>
    %83 = arith.addf %82, %48 : vector<8x16xf32>
    %cst_70 = arith.constant 0.000000e+00 : f32
    %84 = vector.broadcast %cst_70 : f32 to vector<8x16xf32>
    %85 = arith.maximumf %83, %84 : vector<8x16xf32>
    %c0_71 = arith.constant 0 : index
    %c0_72 = arith.constant 0 : index
    %c0_73 = arith.constant 0 : index
    %86 = vector.load %arg9[%c0_71, %c0_72, %c0_73] : memref<1x8x16xf32, #tpu.memory_space<vmem>>, vector<1x8x16xf32>
    %87 = vector.shape_cast %86 : vector<1x8x16xf32> to vector<8x16xf32>
    %88 = vector.shape_cast %85 : vector<8x16xf32> to vector<1x8x16xf32>
    tpu.vector_store %arg9[%c0_71, %c0_72, %c0_73], %88 {strides = array<i32>} : memref<1x8x16xf32, #tpu.memory_space<vmem>>, vector<1x8x16xf32>,
    return
  }
  func.func @transform_0(%arg0: i32) -> (i32, i32, i32) {
    %c0_i32 = arith.constant 0 : i32
    %c0_i32_0 = arith.constant 0 : i32
    %c0_i32_1 = arith.constant 0 : i32
    return %arg0, %c0_i32, %c0_i32_0 : i32, i32, i32
  }
  func.func @transform_1(%arg0: i32) -> (i32, i32, i32) {
    %c0_i32 = arith.constant 0 : i32
    %c0_i32_0 = arith.constant 0 : i32
    %c0_i32_1 = arith.constant 0 : i32
    %c0_i32_2 = arith.constant 0 : i32
    return %c0_i32, %c0_i32_0, %c0_i32_1 : i32, i32, i32
  }
  func.func @transform_2(%arg0: i32) -> (i32, i32, i32) {
    %c0_i32 = arith.constant 0 : i32
    %c0_i32_0 = arith.constant 0 : i32
    %c0_i32_1 = arith.constant 0 : i32
    %c0_i32_2 = arith.constant 0 : i32
    return %c0_i32, %c0_i32_0, %c0_i32_1 : i32, i32, i32
  }
  func.func @transform_3(%arg0: i32) -> (i32, i32) {
    %c0_i32 = arith.constant 0 : i32
    %c0_i32_0 = arith.constant 0 : i32
    %c0_i32_1 = arith.constant 0 : i32
    return %c0_i32, %c0_i32_0 : i32, i32
  }
  func.func @transform_4(%arg0: i32) -> (i32, i32) {
    %c0_i32 = arith.constant 0 : i32
    %c0_i32_0 = arith.constant 0 : i32
    %c0_i32_1 = arith.constant 0 : i32
    return %c0_i32, %c0_i32_0 : i32, i32
  }
  func.func @transform_5(%arg0: i32) -> (i32, i32, i32) {
    %c0_i32 = arith.constant 0 : i32
    %c0_i32_0 = arith.constant 0 : i32
    %c0_i32_1 = arith.constant 0 : i32
    %c0_i32_2 = arith.constant 0 : i32
    return %c0_i32, %c0_i32_0, %c0_i32_1 : i32, i32, i32
  }
  func.func @transform_6(%arg0: i32) -> (i32, i32, i32) {
    %c0_i32 = arith.constant 0 : i32
    %c0_i32_0 = arith.constant 0 : i32
    %c0_i32_1 = arith.constant 0 : i32
    %c0_i32_2 = arith.constant 0 : i32
    return %c0_i32, %c0_i32_0, %c0_i32_1 : i32, i32, i32
  }
  func.func @transform_7(%arg0: i32) -> (i32, i32) {
    %c0_i32 = arith.constant 0 : i32
    %c0_i32_0 = arith.constant 0 : i32
    %c0_i32_1 = arith.constant 0 : i32
    return %c0_i32, %c0_i32_0 : i32, i32
  }
  func.func @transform_8(%arg0: i32) -> (i32, i32, i32) {
    %c0_i32 = arith.constant 0 : i32
    %c0_i32_0 = arith.constant 0 : i32
    %c0_i32_1 = arith.constant 0 : i32
    return %arg0, %c0_i32, %c0_i32_0 : i32, i32, i32
  }
}

</mosaic_0001>

<llo_original>
// kernel: tpu_custom_call.1
$region0: #{tpu_custom_call.1}
  #allocation0 [shape = 'u32[]', space=smem, size = 0x4, offset = 0x4, fixed_abs, tag = 'smem constant byte address 0x4 - core index']
  #allocation1 [shape = 'u32[144,128]{1,0:T(1,128)}', space=vmem, size = 0x12000, scoped, tag = 'internal scratch']
  #allocation2 [shape = 'f32[8,144]{1,0:T(8,128)}', space=vmem, size = 0x2000, scoped, tag = 'scratch operand']
  #allocation3 [shape = 'f32[8,144]{1,0:T(8,128)}', space=vmem, size = 0x2000, scoped, tag = 'scratch operand']
  %s0 = inlined_call_operand.vmem [shape: f32[2,4,16], index: 0, kind: input, shape index: {}]
  %s1 = inlined_call_operand.vmem [shape: bf16[2,8,4], index: 1, kind: input, shape index: {}]
  %s2 = inlined_call_operand.vmem [shape: bf16[2,8,8], index: 2, kind: input, shape index: {}]
  %s3 = inlined_call_operand.vmem [shape: f32[8,3], index: 3, kind: input, shape index: {}]
  %s4 = inlined_call_operand.vmem [shape: bf16[8,4], index: 4, kind: input, shape index: {}]
  %s5 = inlined_call_operand.vmem [shape: bf16[2,8,8], index: 5, kind: input, shape index: {}]
  %s6 = inlined_call_operand.vmem [shape: bf16[2,8,8], index: 6, kind: input, shape index: {}]
  %s7 = inlined_call_operand.vmem [shape: f32[8,2], index: 7, kind: input, shape index: {}]
  %s8 = inlined_call_operand.hbm [shape: f32[2,8,16], index: 8, kind: output, shape index: {}]
  %s9 = sld [smem:[#allocation0]]
  $region65: #{tpu_custom_call.1} parent=0
    _
  %s11 = ssub.s32 1, %s9
  %s12 = scalar_select 0, %s11, %s9
  $region1: #{tpu_custom_call.1} parent=0
    #allocation4 [shape = 'u8[8192]{0}', space=vmem, size = 0x2000, scoped, tag = 'output window, operand 0']
    #allocation5 [shape = 's32[2]{0}', space=sflag, size = 0x8, scoped, tag = 'scoped memory for tpu_custom_call.1']
    %13 = vsyncpa [#allocation5], 0
    %s14 = scalar_lea.sflag [#allocation5], 1
    %15 = vsyncpa %s14, 0
    loop: start=0, step=1, limit=4
    $region2: #{tpu_custom_call.1} parent=1 // loop_pre_header
      _
    $region3: #{tpu_custom_call.1} parent=1 // loop_header
      %s17 = sphi 0, %s21
      %p18 = scmp.ge.s32.totalorder %s17, 4
      %s27 = sphi 0, %s29
      %s30 = sphi 0, %s27
      %s31 = sphi 0, %s30
      %s47 = sphi 0, %s31
      %s51 = sphi 0, %s51
      %s53 = sphi 0, %s51
      %s54 = sphi 0, %s53
      %s68 = sphi 0, %s54
      %s72 = sphi 0, %s72
      %s74 = sphi 0, %s72
      %s75 = sphi 0, %s74
      %s89 = sphi 0, %s75
      %s93 = sphi 0, %s93
      %s95 = sphi 0, %s93
      %s96 = sphi 0, %s95
      %s110 = sphi 0, %s96
      %s114 = sphi 0, %s114
      %s116 = sphi 0, %s114
      %s117 = sphi 0, %s116
      %s131 = sphi 0, %s117
      %s135 = sphi 0, %s135
      %s137 = sphi 0, %s135
      %s138 = sphi 0, %s137
      %s152 = sphi 0, %s138
      %s156 = sphi 0, %s156
      %s158 = sphi 0, %s156
      %s159 = sphi 0, %s158
      %s173 = sphi 0, %s159
      %s177 = sphi 0, %s177
      %s179 = sphi 0, %s177
      %s180 = sphi 0, %s179
      %s194 = sphi 0, %s180
      %s200 = sphi 0, %s202
      %s203 = sphi 0, %s200
      %s204 = sphi 0, %s203
      %s220 = sphi 0, %s204
    $region4: #{tpu_custom_call.1} parent=1 // loop_header_branch
      %20 = sbr.rel (%p18) target = $region8
    $region5: #{tpu_custom_call.1} parent=1 // loop_body
      %s22 = ssub.s32 %s17, 1
      %s23 = ssub.s32 %s17, 2
      %s24 = sadd.s32 %s17, 1
      %s25 = ssub.s32 %s17, %s24
      %p26 = scmp.eq.s32.totalorder %s25, 0
      %s28 = sadd.s32 %s27, 1
      %s29 = scalar_select %p26, %s27, %s28
      %p32 = pneg %p26
      %p33 = scmp.eq.s32.totalorder %s17, 1
      %p34 = por %p32, %p33
      %p35 = scmp.ne.s32.totalorder %s27, %s30
      %p36 = scmp.eq.s32.totalorder %s17, 0
      %p37 = por %p35, %p36
      %p38 = scmp.ne.s32.totalorder %s27, %s30
      %p39 = scmp.eq.s32.totalorder %s22, 1
      %p40 = por %p38, %p39
      %p41 = scmp.ne.s32.totalorder %s30, %s31
      %p42 = scmp.eq.s32.totalorder %s22, 0
      %p43 = por %p41, %p42
      %p44 = scmp.ne.s32.totalorder %s30, %s31
      %p45 = scmp.eq.s32.totalorder %s23, 1
      %p46 = por %p44, %p45
      %p48 = scmp.ne.s32.totalorder %s31, %s47
      %p49 = scmp.eq.s32.totalorder %s23, 0
      %p50 = por %p48, %p49
      %s52 = sadd.s32 %s51, 1
      %p55 = scmp.eq.s32.totalorder %s17, 1
      %p56 = scmp.ne.s32.totalorder %s51, %s53
      %p57 = scmp.eq.s32.totalorder %s17, 0
      %p58 = por %p56, %p57
      %p59 = scmp.ne.s32.totalorder %s51, %s53
      %p60 = scmp.eq.s32.totalorder %s22, 1
      %p61 = por %p59, %p60
      %p62 = scmp.ne.s32.totalorder %s53, %s54
      %p63 = scmp.eq.s32.totalorder %s22, 0
      %p64 = por %p62, %p63
      %p65 = scmp.ne.s32.totalorder %s53, %s54
      %p66 = scmp.eq.s32.totalorder %s23, 1
      %p67 = por %p65, %p66
      %p69 = scmp.ne.s32.totalorder %s54, %s68
      %p70 = scmp.eq.s32.totalorder %s23, 0
      %p71 = por %p69, %p70
      %s73 = sadd.s32 %s72, 1
      %p76 = scmp.eq.s32.totalorder %s17, 1
      %p77 = scmp.ne.s32.totalorder %s72, %s74
      %p78 = scmp.eq.s32.totalorder %s17, 0
      %p79 = por %p77, %p78
      %p80 = scmp.ne.s32.totalorder %s72, %s74
      %p81 = scmp.eq.s32.totalorder %s22, 1
      %p82 = por %p80, %p81
      %p83 = scmp.ne.s32.totalorder %s74, %s75
      %p84 = scmp.eq.s32.totalorder %s22, 0
      %p85 = por %p83, %p84
      %p86 = scmp.ne.s32.totalorder %s74, %s75
      %p87 = scmp.eq.s32.totalorder %s23, 1
      %p88 = por %p86, %p87
      %p90 = scmp.ne.s32.totalorder %s75, %s89
      %p91 = scmp.eq.s32.totalorder %s23, 0
      %p92 = por %p90, %p91
      %s94 = sadd.s32 %s93, 1
      %p97 = scmp.eq.s32.totalorder %s17, 1
      %p98 = scmp.ne.s32.totalorder %s93, %s95
      %p99 = scmp.eq.s32.totalorder %s17, 0
      %p100 = por %p98, %p99
      %p101 = scmp.ne.s32.totalorder %s93, %s95
      %p102 = scmp.eq.s32.totalorder %s22, 1
      %p103 = por %p101, %p102
      %p104 = scmp.ne.s32.totalorder %s95, %s96
      %p105 = scmp.eq.s32.totalorder %s22, 0
      %p106 = por %p104, %p105
      %p107 = scmp.ne.s32.totalorder %s95, %s96
      %p108 = scmp.eq.s32.totalorder %s23, 1
      %p109 = por %p107, %p108
      %p111 = scmp.ne.s32.totalorder %s96, %s110
      %p112 = scmp.eq.s32.totalorder %s23, 0
      %p113 = por %p111, %p112
      %s115 = sadd.s32 %s114, 1
      %p118 = scmp.eq.s32.totalorder %s17, 1
      %p119 = scmp.ne.s32.totalorder %s114, %s116
      %p120 = scmp.eq.s32.totalorder %s17, 0
      %p121 = por %p119, %p120
      %p122 = scmp.ne.s32.totalorder %s114, %s116
      %p123 = scmp.eq.s32.totalorder %s22, 1
      %p124 = por %p122, %p123
      %p125 = scmp.ne.s32.totalorder %s116, %s117
      %p126 = scmp.eq.s32.totalorder %s22, 0
      %p127 = por %p125, %p126
      %p128 = scmp.ne.s32.totalorder %s116, %s117
      %p129 = scmp.eq.s32.totalorder %s23, 1
      %p130 = por %p128, %p129
      %p132 = scmp.ne.s32.totalorder %s117, %s131
      %p133 = scmp.eq.s32.totalorder %s23, 0
      %p134 = por %p132, %p133
      %s136 = sadd.s32 %s135, 1
      %p139 = scmp.eq.s32.totalorder %s17, 1
      %p140 = scmp.ne.s32.totalorder %s135, %s137
      %p141 = scmp.eq.s32.totalorder %s17, 0
      %p142 = por %p140, %p141
      %p143 = scmp.ne.s32.totalorder %s135, %s137
      %p144 = scmp.eq.s32.totalorder %s22, 1
      %p145 = por %p143, %p144
      %p146 = scmp.ne.s32.totalorder %s137, %s138
      %p147 = scmp.eq.s32.totalorder %s22, 0
      %p148 = por %p146, %p147
      %p149 = scmp.ne.s32.totalorder %s137, %s138
      %p150 = scmp.eq.s32.totalorder %s23, 1
      %p151 = por %p149, %p150
      %p153 = scmp.ne.s32.totalorder %s138, %s152
      %p154 = scmp.eq.s32.totalorder %s23, 0
      %p155 = por %p153, %p154
      %s157 = sadd.s32 %s156, 1
      %p160 = scmp.eq.s32.totalorder %s17, 1
      %p161 = scmp.ne.s32.totalorder %s156, %s158
      %p162 = scmp.eq.s32.totalorder %s17, 0
      %p163 = por %p161, %p162
      %p164 = scmp.ne.s32.totalorder %s156, %s158
      %p165 = scmp.eq.s32.totalorder %s22, 1
      %p166 = por %p164, %p165
      %p167 = scmp.ne.s32.totalorder %s158, %s159
      %p168 = scmp.eq.s32.totalorder %s22, 0
      %p169 = por %p167, %p168
      %p170 = scmp.ne.s32.totalorder %s158, %s159
      %p171 = scmp.eq.s32.totalorder %s23, 1
      %p172 = por %p170, %p171
      %p174 = scmp.ne.s32.totalorder %s159, %s173
      %p175 = scmp.eq.s32.totalorder %s23, 0
      %p176 = por %p174, %p175
      %s178 = sadd.s32 %s177, 1
      %p181 = scmp.eq.s32.totalorder %s17, 1
      %p182 = scmp.ne.s32.totalorder %s177, %s179
      %p183 = scmp.eq.s32.totalorder %s17, 0
      %p184 = por %p182, %p183
      %p185 = scmp.ne.s32.totalorder %s177, %s179
      %p186 = scmp.eq.s32.totalorder %s22, 1
      %p187 = por %p185, %p186
      %p188 = scmp.ne.s32.totalorder %s179, %s180
      %p189 = scmp.eq.s32.totalorder %s22, 0
      %p190 = por %p188, %p189
      %p191 = scmp.ne.s32.totalorder %s179, %s180
      %p192 = scmp.eq.s32.totalorder %s23, 1
      %p193 = por %p191, %p192
      %p195 = scmp.ne.s32.totalorder %s180, %s194
      %p196 = scmp.eq.s32.totalorder %s23, 0
      %p197 = por %p195, %p196
      %s198 = ssub.s32 %s17, %s24
      %p199 = scmp.eq.s32.totalorder %s198, 0
      %s201 = sadd.s32 %s200, 1
      %s202 = scalar_select %p199, %s200, %s201
      %p205 = pneg %p199
      %p206 = scmp.eq.s32.totalorder %s17, 1
      %p207 = por %p205, %p206
      %p208 = scmp.ne.s32.totalorder %s200, %s203
      %p209 = scmp.eq.s32.totalorder %s17, 0
      %p210 = por %p208, %p209
      %p211 = scmp.ne.s32.totalorder %s200, %s203
      %p212 = scmp.eq.s32.totalorder %s22, 1
      %p213 = por %p211, %p212
      %p214 = scmp.ne.s32.totalorder %s203, %s204
      %p215 = scmp.eq.s32.totalorder %s22, 0
      %p216 = por %p214, %p215
      %p217 = scmp.ne.s32.totalorder %s203, %s204
      %p218 = scmp.eq.s32.totalorder %s23, 1
      %p219 = por %p217, %p218
      %p221 = scmp.ne.s32.totalorder %s204, %s220
      %p222 = scmp.eq.s32.totalorder %s23, 0
      %p223 = por %p221, %p222
      %p224 = scmp.le.s32.totalorder 1, %s17
      %p225 = scmp.lt.s32.totalorder %s17, 3
      %p226 = pnand %p224, %p225
      %p227 = pneg %p226
      // Predicated region
      $region9: #{tpu_custom_call.1} parent=5 // pred_check
        _
      $region10: #{tpu_custom_call.1} parent=5 // pred_check_branch
        %229 = sbr.rel (%p226) target = $region12
      $region11: #{tpu_custom_call.1} parent=5 // pred_region
        %s230 = ssub.s32 %s17, 1
        // Predicated region
        $region13: #{tpu_custom_call.1} parent=11 // pred_check
          %p231 = pneg %p64
        $region14: #{tpu_custom_call.1} parent=11 // pred_check_branch
          %233 = sbr.rel (%p231) target = $region16
        $region15: #{tpu_custom_call.1} parent=11 // pred_region
          _
        $region16: #{tpu_custom_call.1} parent=11 // pred_fallthru
          _
        // Predicated region
        $region17: #{tpu_custom_call.1} parent=11 // pred_check
          %p234 = pneg %p85
        $region18: #{tpu_custom_call.1} parent=11 // pred_check_branch
          %236 = sbr.rel (%p234) target = $region20
        $region19: #{tpu_custom_call.1} parent=11 // pred_region
          _
        $region20: #{tpu_custom_call.1} parent=11 // pred_fallthru
          _
        // Predicated region
        $region21: #{tpu_custom_call.1} parent=11 // pred_check
          %p237 = pneg %p106
        $region22: #{tpu_custom_call.1} parent=11 // pred_check_branch
          %239 = sbr.rel (%p237) target = $region24
        $region23: #{tpu_custom_call.1} parent=11 // pred_region
          _
        $region24: #{tpu_custom_call.1} parent=11 // pred_fallthru
          _
        // Predicated region
        $region25: #{tpu_custom_call.1} parent=11 // pred_check
          %p240 = pneg %p127
        $region26: #{tpu_custom_call.1} parent=11 // pred_check_branch
          %242 = sbr.rel (%p240) target = $region28
        $region27: #{tpu_custom_call.1} parent=11 // pred_region
          _
        $region28: #{tpu_custom_call.1} parent=11 // pred_fallthru
          _
        // Predicated region
        $region29: #{tpu_custom_call.1} parent=11 // pred_check
          %p243 = pneg %p148
        $region30: #{tpu_custom_call.1} parent=11 // pred_check_branch
          %245 = sbr.rel (%p243) target = $region32
        $region31: #{tpu_custom_call.1} parent=11 // pred_region
          _
        $region32: #{tpu_custom_call.1} parent=11 // pred_fallthru
          _
        // Predicated region
        $region33: #{tpu_custom_call.1} parent=11 // pred_check
          %p246 = pneg %p169
        $region34: #{tpu_custom_call.1} parent=11 // pred_check_branch
          %248 = sbr.rel (%p246) target = $region36
        $region35: #{tpu_custom_call.1} parent=11 // pred_region
          _
        $region36: #{tpu_custom_call.1} parent=11 // pred_fallthru
          _
        // Predicated region
        $region37: #{tpu_custom_call.1} parent=11 // pred_check
          %p249 = pneg %p190
        $region38: #{tpu_custom_call.1} parent=11 // pred_check_branch
          %251 = sbr.rel (%p249) target = $region40
        $region39: #{tpu_custom_call.1} parent=11 // pred_region
          _
        $region40: #{tpu_custom_call.1} parent=11 // pred_fallthru
          _
      $region12: #{tpu_custom_call.1} parent=5 // pred_fallthru
        _
      %p252 = scmp.lt.s32.totalorder %s17, 2
      // Predicated region
      $region41: #{tpu_custom_call.1} parent=5 // pred_check
        %p253 = pneg %p252
      $region42: #{tpu_custom_call.1} parent=5 // pred_check_branch
        %255 = sbr.rel (%p253) target = $region44
      $region43: #{tpu_custom_call.1} parent=5 // pred_region
        // Predicated region
        $region45: #{tpu_custom_call.1} parent=43 // pred_check
          %p256 = pneg %p37
        $region46: #{tpu_custom_call.1} parent=43 // pred_check_branch
          %258 = sbr.rel (%p256) target = $region48
        $region47: #{tpu_custom_call.1} parent=43 // pred_region
          %p259 = scmp.lt.s32.totalorder %s17, 1
          %s260 = scalar_select %p259, %s17, 1
          %s261 = smul.addr %s260, 4
          %s262 = scalar_lea.vmem %s0, %s261
        $region48: #{tpu_custom_call.1} parent=43 // pred_fallthru
          _
      $region44: #{tpu_custom_call.1} parent=5 // pred_fallthru
        _
      %p263 = scmp.le.s32.totalorder 1, %s17
      %p264 = scmp.lt.s32.totalorder %s17, 3
      %p265 = pnand %p263, %p264
      %p266 = pneg %p265
      // Predicated region
      $region49: #{tpu_custom_call.1} parent=5 // pred_check
        _
      $region50: #{tpu_custom_call.1} parent=5 // pred_check_branch
        %268 = sbr.rel (%p265) target = $region52
      $region51: #{tpu_custom_call.1} parent=5 // pred_region
        %s269 = ssub.s32 %s17, 1
        %p270 = scmp.lt.s32.totalorder %s22, 1
        %s271 = scalar_select %p270, %s22, 1
        %s272 = smul.addr %s271, 4
        %s273 = scalar_lea.vmem %s0, %s272
        %p274 = pneg %p43
        %p275 = pneg %p40
        %p276 = pneg %p64
        %p277 = pneg %p61
        %p278 = pneg %p85
        %p279 = pneg %p82
        %p280 = pneg %p106
        %p281 = pneg %p103
        %p282 = pneg %p127
        %p283 = pneg %p124
        %p284 = pneg %p148
        %p285 = pneg %p145
        %p286 = pneg %p169
        %p287 = pneg %p166
        %p288 = pneg %p190
        %p289 = pneg %p187
        %p290 = pneg %p216
        %p291 = pneg %p213
        %s292 = sand.u32 %s203, 1
        %s293 = scalar_lea.sflag [#allocation5], %s292
        %s294 = sand.u32 %s203, 1
        %s295 = smul.addr %s294, 8
        %s296 = scalar_lea.vmem [#allocation4], %s295
        %p297 = scmp.lt.s32.totalorder %s22, 1
        %s298 = scalar_select %p297, %s22, 1
        %s299 = smul.addr %s298, 4
        %s300 = scalar_lea.vmem %s0, %s299
        %302 = vst [vmem:[#allocation2] sm:$0xff] 0.0
        %303 = vst [vmem:[#allocation3] sm:$0xff] 0.0
        %v304 = vld [vmem:[%s300] sm:$0xf]
        %vm305 = vcmask 125952
        %306 = vst.msk [vmem:[#allocation2 + $0x8] sm:$0xf] %vm305, %v304
        %v307 = vld [vmem:[#allocation2] sm:$0xf]
        %v308 = vld [vmem:[#allocation2 + $0x8] sm:$0xf]
        %v309 = vpack.c.bf16 %v307, %v307
        %v310 = vpack.c.bf16 %v308, %v308
        %v311 = vld [vmem:[%s1] sm:$0xf]
        %s312 = scalar_lea.vmem %s1, 4
        %v313 = vld [vmem:[%s312] sm:$0xf]
        %vm314 = vcmask 31744
        %v316 = vsel %vm314, %v313, 0
        %vm318 = vcmask 1041408
        %v320 = vsel %vm318, %v310, 0
        %322 = vmatprep.subr.bf16.mxu0 0
        %323 = vmatpush1.bf16.msra.mxu0 0
        %324 = vmatprep.subr.bf16.mxu0 0
        %325 = vmatpush1.bf16.msra.mxu0 0
        %326 = vmatprep.subr.bf16.mxu0 0
        %327 = vmatpush1.bf16.msra.mxu0 0
        %328 = vmatprep.subr.bf16.mxu0 0
        %329 = vmatpush1.bf16.msra.mxu0 0
        %330 = vmatprep.subr.bf16.mxu0 0
        %331 = vmatpush1.bf16.msra.mxu0 0
        %332 = vmatprep.subr.bf16.mxu0 0
        %333 = vmatpush1.bf16.msra.mxu0 0
        %334 = vmatprep.subr.bf16.mxu0 0
        %335 = vmatpush1.bf16.msra.mxu0 0
        %336 = vmatprep.subr.bf16.mxu0 0
        %337 = vmatpush1.bf16.msra.mxu0 %v320
        %338 = vmatprep.subr.bf16.mxu0 0
        %339 = vmatpush2.bf16.msra.mxu0 0
        %340 = vmatprep.subr.bf16.mxu0 0
        %341 = vmatpush2.bf16.msra.mxu0 0
        %342 = vmatprep.subr.bf16.mxu0 0
        %343 = vmatpush2.bf16.msra.mxu0 0
        %344 = vmatprep.subr.bf16.mxu0 0
        %345 = vmatpush2.bf16.msra.mxu0 0
        %346 = vmatprep.subr.bf16.mxu0 0
        %347 = vmatpush2.bf16.msra.mxu0 0
        %348 = vmatprep.subr.bf16.mxu0 0
        %349 = vmatpush2.bf16.msra.mxu0 0
        %350 = vmatprep.subr.bf16.mxu0 0
        %351 = vmatpush2.bf16.msra.mxu0 0
        %352 = vmatprep.subr.bf16.mxu0 0
        %353 = vmatpush2.bf16.msra.mxu0 0
        %354 = vmatprep.mubr.bf16.mxu0 0
        %355 = vmatmul.mubr.bf16.gmra.mxu0 %v316
        %v356 = vpop.f32.mrf.mxu0
        %v357 = vadd.f32 0.0, %v356
        %v358 = vpop.f32.mrf.mxu0
        %v359 = vpop.f32.mrf.mxu0
        %v360 = vpop.f32.mrf.mxu0
        %361 = vdwg.mxu0
        %364 = vrot.lane.b32.xlu0 %v309, 1
        %v365 = vpop.permute.xlu0 %364
        %366 = vrot.lane.b32.xlu0 %v310, 1
        %v367 = vpop.permute.xlu0 %366
        %vm368 = vcmask 7168
        %v369 = vsel %vm368, %v365, %v367
        %v371 = vsel %vm314, %v311, 0
        %v374 = vsel %vm318, %v369, 0
        %376 = vmatprep.subr.bf16.mxu0 0
        %377 = vmatpush1.bf16.msra.mxu0 0
        %378 = vmatprep.subr.bf16.mxu0 0
        %379 = vmatpush1.bf16.msra.mxu0 0
        %380 = vmatprep.subr.bf16.mxu0 0
        %381 = vmatpush1.bf16.msra.mxu0 0
        %382 = vmatprep.subr.bf16.mxu0 0
        %383 = vmatpush1.bf16.msra.mxu0 0
        %384 = vmatprep.subr.bf16.mxu0 0
        %385 = vmatpush1.bf16.msra.mxu0 0
        %386 = vmatprep.subr.bf16.mxu0 0
        %387 = vmatpush1.bf16.msra.mxu0 0
        %388 = vmatprep.subr.bf16.mxu0 0
        %389 = vmatpush1.bf16.msra.mxu0 0
        %390 = vmatprep.subr.bf16.mxu0 0
        %391 = vmatpush1.bf16.msra.mxu0 %v374
        %392 = vmatprep.subr.bf16.mxu0 0
        %393 = vmatpush2.bf16.msra.mxu0 0
        %394 = vmatprep.subr.bf16.mxu0 0
        %395 = vmatpush2.bf16.msra.mxu0 0
        %396 = vmatprep.subr.bf16.mxu0 0
        %397 = vmatpush2.bf16.msra.mxu0 0
        %398 = vmatprep.subr.bf16.mxu0 0
        %399 = vmatpush2.bf16.msra.mxu0 0
        %400 = vmatprep.subr.bf16.mxu0 0
        %401 = vmatpush2.bf16.msra.mxu0 0
        %402 = vmatprep.subr.bf16.mxu0 0
        %403 = vmatpush2.bf16.msra.mxu0 0
        %404 = vmatprep.subr.bf16.mxu0 0
        %405 = vmatpush2.bf16.msra.mxu0 0
        %406 = vmatprep.subr.bf16.mxu0 0
        %407 = vmatpush2.bf16.msra.mxu0 0
        %408 = vmatprep.mubr.bf16.mxu0 0
        %409 = vmatmul.mubr.bf16.gmra.mxu0 %v371
        %v410 = vpop.f32.mrf.mxu0
        %v411 = vadd.f32 %v357, %v410
        %v412 = vpop.f32.mrf.mxu0
        %v413 = vpop.f32.mrf.mxu0
        %v414 = vpop.f32.mrf.mxu0
        %415 = vdwg.mxu0
        %v416 = vld [vmem:[%s3] sm:$0xff]
        %418 = vset.pattern.permute.xlu0 0
        %419 = vperm.xlu0 %418, %v416
        %v420 = vpop.permute.xlu0 %419
        %v422 = vadd.f32 %v411, %v420
        %v423 = vmax.f32 %v422, 0.0
        %vm424 = vcmask 130048
        %425 = vst.msk [vmem:[#allocation3 + $0x8] sm:$0xff] %vm424, %v423
        %v426 = vld [vmem:[#allocation3] sm:$0xff]
        %v427 = vld [vmem:[#allocation3 + $0x8] sm:$0xff]
        %v428 = vpack.c.bf16 %v426, %v426
        %v429 = vpack.c.bf16 %v427, %v427
        %v430 = vld [vmem:[%s2] sm:$0xf]
        %s431 = scalar_lea.vmem %s2, 4
        %v432 = vld [vmem:[%s431] sm:$0xf]
        %vm433 = vcmask 64512
        %v435 = vsel %vm433, %v432, 0
        %vm437 = vcmask 1043456
        %v439 = vsel %vm437, %v429, 0
        %441 = vmatprep.subr.bf16.mxu0 0
        %442 = vmatpush1.bf16.msra.mxu0 0
        %443 = vmatprep.subr.bf16.mxu0 0
        %444 = vmatpush1.bf16.msra.mxu0 0
        %445 = vmatprep.subr.bf16.mxu0 0
        %446 = vmatpush1.bf16.msra.mxu0 0
        %447 = vmatprep.subr.bf16.mxu0 0
        %448 = vmatpush1.bf16.msra.mxu0 0
        %449 = vmatprep.subr.bf16.mxu0 0
        %450 = vmatpush1.bf16.msra.mxu0 0
        %451 = vmatprep.subr.bf16.mxu0 0
        %452 = vmatpush1.bf16.msra.mxu0 0
        %453 = vmatprep.subr.bf16.mxu0 0
        %454 = vmatpush1.bf16.msra.mxu0 0
        %455 = vmatprep.subr.bf16.mxu0 0
        %456 = vmatpush1.bf16.msra.mxu0 %v439
        %457 = vmatprep.subr.bf16.mxu0 0
        %458 = vmatpush2.bf16.msra.mxu0 0
        %459 = vmatprep.subr.bf16.mxu0 0
        %460 = vmatpush2.bf16.msra.mxu0 0
        %461 = vmatprep.subr.bf16.mxu0 0
        %462 = vmatpush2.bf16.msra.mxu0 0
        %463 = vmatprep.subr.bf16.mxu0 0
        %464 = vmatpush2.bf16.msra.mxu0 0
        %465 = vmatprep.subr.bf16.mxu0 0
        %466 = vmatpush2.bf16.msra.mxu0 0
        %467 = vmatprep.subr.bf16.mxu0 0
        %468 = vmatpush2.bf16.msra.mxu0 0
        %469 = vmatprep.subr.bf16.mxu0 0
        %470 = vmatpush2.bf16.msra.mxu0 0
        %471 = vmatprep.subr.bf16.mxu0 0
        %472 = vmatpush2.bf16.msra.mxu0 0
        %473 = vmatprep.mubr.bf16.mxu0 0
        %474 = vmatmul.mubr.bf16.gmra.mxu0 %v435
        %v475 = vpop.f32.mrf.mxu0
        %v476 = vadd.f32 0.0, %v475
        %v477 = vpop.f32.mrf.mxu0
        %v478 = vpop.f32.mrf.mxu0
        %v479 = vpop.f32.mrf.mxu0
        %480 = vdwg.mxu0
        %483 = vrot.lane.b32.xlu0 %v428, 1
        %v484 = vpop.permute.xlu0 %483
        %485 = vrot.lane.b32.xlu0 %v429, 1
        %v486 = vpop.permute.xlu0 %485
        %v487 = vsel %vm368, %v484, %v486
        %v489 = vsel %vm433, %v430, 0
        %v492 = vsel %vm437, %v487, 0
        %494 = vmatprep.subr.bf16.mxu0 0
        %495 = vmatpush1.bf16.msra.mxu0 0
        %496 = vmatprep.subr.bf16.mxu0 0
        %497 = vmatpush1.bf16.msra.mxu0 0
        %498 = vmatprep.subr.bf16.mxu0 0
        %499 = vmatpush1.bf16.msra.mxu0 0
        %500 = vmatprep.subr.bf16.mxu0 0
        %501 = vmatpush1.bf16.msra.mxu0 0
        %502 = vmatprep.subr.bf16.mxu0 0
        %503 = vmatpush1.bf16.msra.mxu0 0
        %504 = vmatprep.subr.bf16.mxu0 0
        %505 = vmatpush1.bf16.msra.mxu0 0
        %506 = vmatprep.subr.bf16.mxu0 0
        %507 = vmatpush1.bf16.msra.mxu0 0
        %508 = vmatprep.subr.bf16.mxu0 0
        %509 = vmatpush1.bf16.msra.mxu0 %v492
        %510 = vmatprep.subr.bf16.mxu0 0
        %511 = vmatpush2.bf16.msra.mxu0 0
        %512 = vmatprep.subr.bf16.mxu0 0
        %513 = vmatpush2.bf16.msra.mxu0 0
        %514 = vmatprep.subr.bf16.mxu0 0
        %515 = vmatpush2.bf16.msra.mxu0 0
        %516 = vmatprep.subr.bf16.mxu0 0
        %517 = vmatpush2.bf16.msra.mxu0 0
        %518 = vmatprep.subr.bf16.mxu0 0
        %519 = vmatpush2.bf16.msra.mxu0 0
        %520 = vmatprep.subr.bf16.mxu0 0
        %521 = vmatpush2.bf16.msra.mxu0 0
        %522 = vmatprep.subr.bf16.mxu0 0
        %523 = vmatpush2.bf16.msra.mxu0 0
        %524 = vmatprep.subr.bf16.mxu0 0
        %525 = vmatpush2.bf16.msra.mxu0 0
        %526 = vmatprep.mubr.bf16.mxu0 0
        %527 = vmatmul.mubr.bf16.gmra.mxu0 %v489
        %v528 = vpop.f32.mrf.mxu0
        %v529 = vadd.f32 %v476, %v528
        %v530 = vpop.f32.mrf.mxu0
        %v531 = vpop.f32.mrf.mxu0
        %v532 = vpop.f32.mrf.mxu0
        %533 = vdwg.mxu0
        %v534 = vld [vmem:[%s3] sm:$0xff]
        %536 = vset.pattern.permute.xlu0 1
        %537 = vperm.xlu0 %536, %v534
        %v538 = vpop.permute.xlu0 %537
        %v540 = vadd.f32 %v529, %v538
        %v541 = vmax.f32 %v540, 0.0
        %v542 = vld [vmem:[%s4] sm:$0xf]
        %543 = vset.pattern.permute.xlu0 2
        %544 = vperm.xlu0 %543, %v534
        %v545 = vpop.permute.xlu0 %544
        %v548 = vsel %vm314, %v542, 0
        %550 = vmatprep.subr.bf16.mxu0 0
        %551 = vmatpush1.bf16.msra.mxu0 0
        %552 = vmatprep.subr.bf16.mxu0 0
        %553 = vmatpush1.bf16.msra.mxu0 0
        %554 = vmatprep.subr.bf16.mxu0 0
        %555 = vmatpush1.bf16.msra.mxu0 0
        %556 = vmatprep.subr.bf16.mxu0 0
        %557 = vmatpush1.bf16.msra.mxu0 0
        %558 = vmatprep.subr.bf16.mxu0 0
        %559 = vmatpush1.bf16.msra.mxu0 0
        %560 = vmatprep.subr.bf16.mxu0 0
        %561 = vmatpush1.bf16.msra.mxu0 0
        %562 = vmatprep.subr.bf16.mxu0 0
        %563 = vmatpush1.bf16.msra.mxu0 0
        %564 = vmatprep.subr.bf16.mxu0 0
        %565 = vmatpush1.bf16.msra.mxu0 %v320
        %566 = vmatprep.subr.bf16.mxu0 0
        %567 = vmatpush2.bf16.msra.mxu0 0
        %568 = vmatprep.subr.bf16.mxu0 0
        %569 = vmatpush2.bf16.msra.mxu0 0
        %570 = vmatprep.subr.bf16.mxu0 0
        %571 = vmatpush2.bf16.msra.mxu0 0
        %572 = vmatprep.subr.bf16.mxu0 0
        %573 = vmatpush2.bf16.msra.mxu0 0
        %574 = vmatprep.subr.bf16.mxu0 0
        %575 = vmatpush2.bf16.msra.mxu0 0
        %576 = vmatprep.subr.bf16.mxu0 0
        %577 = vmatpush2.bf16.msra.mxu0 0
        %578 = vmatprep.subr.bf16.mxu0 0
        %579 = vmatpush2.bf16.msra.mxu0 0
        %580 = vmatprep.subr.bf16.mxu0 0
        %581 = vmatpush2.bf16.msra.mxu0 0
        %582 = vmatprep.mubr.bf16.mxu0 0
        %583 = vmatmul.mubr.bf16.gmra.mxu0 %v548
        %v584 = vpop.f32.mrf.mxu0
        %v585 = vadd.f32 %v545, %v584
        %v586 = vpop.f32.mrf.mxu0
        %v587 = vpop.f32.mrf.mxu0
        %v588 = vpop.f32.mrf.mxu0
        %589 = vdwg.mxu0
        %v590 = vadd.f32 %v541, %v585
        %v591 = vmax.f32 %v590, 0.0
        %592 = vst.msk [vmem:[#allocation2 + $0x8] sm:$0xff] %vm424, %v591
        %v593 = vld [vmem:[#allocation2] sm:$0xff]
        %v594 = vld [vmem:[#allocation2 + $0x8] sm:$0xff]
        %v595 = vpack.c.bf16 %v593, %v593
        %v596 = vpack.c.bf16 %v594, %v594
        %v597 = vld [vmem:[%s5] sm:$0xf]
        %s598 = scalar_lea.vmem %s5, 4
        %v599 = vld [vmem:[%s598] sm:$0xf]
        %v601 = vsel %vm433, %v599, 0
        %v604 = vsel %vm437, %v596, 0
        %606 = vmatprep.subr.bf16.mxu0 0
        %607 = vmatpush1.bf16.msra.mxu0 0
        %608 = vmatprep.subr.bf16.mxu0 0
        %609 = vmatpush1.bf16.msra.mxu0 0
        %610 = vmatprep.subr.bf16.mxu0 0
        %611 = vmatpush1.bf16.msra.mxu0 0
        %612 = vmatprep.subr.bf16.mxu0 0
        %613 = vmatpush1.bf16.msra.mxu0 0
        %614 = vmatprep.subr.bf16.mxu0 0
        %615 = vmatpush1.bf16.msra.mxu0 0
        %616 = vmatprep.subr.bf16.mxu0 0
        %617 = vmatpush1.bf16.msra.mxu0 0
        %618 = vmatprep.subr.bf16.mxu0 0
        %619 = vmatpush1.bf16.msra.mxu0 0
        %620 = vmatprep.subr.bf16.mxu0 0
        %621 = vmatpush1.bf16.msra.mxu0 %v604
        %622 = vmatprep.subr.bf16.mxu0 0
        %623 = vmatpush2.bf16.msra.mxu0 0
        %624 = vmatprep.subr.bf16.mxu0 0
        %625 = vmatpush2.bf16.msra.mxu0 0
        %626 = vmatprep.subr.bf16.mxu0 0
        %627 = vmatpush2.bf16.msra.mxu0 0
        %628 = vmatprep.subr.bf16.mxu0 0
        %629 = vmatpush2.bf16.msra.mxu0 0
        %630 = vmatprep.subr.bf16.mxu0 0
        %631 = vmatpush2.bf16.msra.mxu0 0
        %632 = vmatprep.subr.bf16.mxu0 0
        %633 = vmatpush2.bf16.msra.mxu0 0
        %634 = vmatprep.subr.bf16.mxu0 0
        %635 = vmatpush2.bf16.msra.mxu0 0
        %636 = vmatprep.subr.bf16.mxu0 0
        %637 = vmatpush2.bf16.msra.mxu0 0
        %638 = vmatprep.mubr.bf16.mxu0 0
        %639 = vmatmul.mubr.bf16.gmra.mxu0 %v601
        %v640 = vpop.f32.mrf.mxu0
        %v641 = vadd.f32 0.0, %v640
        %v642 = vpop.f32.mrf.mxu0
        %v643 = vpop.f32.mrf.mxu0
        %v644 = vpop.f32.mrf.mxu0
        %645 = vdwg.mxu0
        %648 = vrot.lane.b32.xlu0 %v595, 2
        %v649 = vpop.permute.xlu0 %648
        %650 = vrot.lane.b32.xlu0 %v596, 2
        %v651 = vpop.permute.xlu0 %650
        %vm652 = vcmask 15360
        %v653 = vsel %vm652, %v649, %v651
        %v655 = vsel %vm433, %v597, 0
        %v658 = vsel %vm437, %v653, 0
        %660 = vmatprep.subr.bf16.mxu0 0
        %661 = vmatpush1.bf16.msra.mxu0 0
        %662 = vmatprep.subr.bf16.mxu0 0
        %663 = vmatpush1.bf16.msra.mxu0 0
        %664 = vmatprep.subr.bf16.mxu0 0
        %665 = vmatpush1.bf16.msra.mxu0 0
        %666 = vmatprep.subr.bf16.mxu0 0
        %667 = vmatpush1.bf16.msra.mxu0 0
        %668 = vmatprep.subr.bf16.mxu0 0
        %669 = vmatpush1.bf16.msra.mxu0 0
        %670 = vmatprep.subr.bf16.mxu0 0
        %671 = vmatpush1.bf16.msra.mxu0 0
        %672 = vmatprep.subr.bf16.mxu0 0
        %673 = vmatpush1.bf16.msra.mxu0 0
        %674 = vmatprep.subr.bf16.mxu0 0
        %675 = vmatpush1.bf16.msra.mxu0 %v658
        %676 = vmatprep.subr.bf16.mxu0 0
        %677 = vmatpush2.bf16.msra.mxu0 0
        %678 = vmatprep.subr.bf16.mxu0 0
        %679 = vmatpush2.bf16.msra.mxu0 0
        %680 = vmatprep.subr.bf16.mxu0 0
        %681 = vmatpush2.bf16.msra.mxu0 0
        %682 = vmatprep.subr.bf16.mxu0 0
        %683 = vmatpush2.bf16.msra.mxu0 0
        %684 = vmatprep.subr.bf16.mxu0 0
        %685 = vmatpush2.bf16.msra.mxu0 0
        %686 = vmatprep.subr.bf16.mxu0 0
        %687 = vmatpush2.bf16.msra.mxu0 0
        %688 = vmatprep.subr.bf16.mxu0 0
        %689 = vmatpush2.bf16.msra.mxu0 0
        %690 = vmatprep.subr.bf16.mxu0 0
        %691 = vmatpush2.bf16.msra.mxu0 0
        %692 = vmatprep.mubr.bf16.mxu0 0
        %693 = vmatmul.mubr.bf16.gmra.mxu0 %v655
        %v694 = vpop.f32.mrf.mxu0
        %v695 = vadd.f32 %v641, %v694
        %v696 = vpop.f32.mrf.mxu0
        %v697 = vpop.f32.mrf.mxu0
        %v698 = vpop.f32.mrf.mxu0
        %699 = vdwg.mxu0
        %v700 = vld [vmem:[%s7] sm:$0xff]
        %702 = vset.pattern.permute.xlu0 0
        %703 = vperm.xlu0 %702, %v700
        %v704 = vpop.permute.xlu0 %703
        %v706 = vadd.f32 %v695, %v704
        %v707 = vmax.f32 %v706, 0.0
        %708 = vst.msk [vmem:[#allocation3 + $0x8] sm:$0xff] %vm424, %v707
        %v709 = vld [vmem:[#allocation3] sm:$0xff]
        %v710 = vld [vmem:[#allocation3 + $0x8] sm:$0xff]
        %v711 = vpack.c.bf16 %v709, %v709
        %v712 = vpack.c.bf16 %v710, %v710
        %v713 = vld [vmem:[%s6] sm:$0xf]
        %s714 = scalar_lea.vmem %s6, 4
        %v715 = vld [vmem:[%s714] sm:$0xf]
        %v717 = vsel %vm433, %v715, 0
        %v720 = vsel %vm437, %v712, 0
        %722 = vmatprep.subr.bf16.mxu0 0
        %723 = vmatpush1.bf16.msra.mxu0 0
        %724 = vmatprep.subr.bf16.mxu0 0
        %725 = vmatpush1.bf16.msra.mxu0 0
        %726 = vmatprep.subr.bf16.mxu0 0
        %727 = vmatpush1.bf16.msra.mxu0 0
        %728 = vmatprep.subr.bf16.mxu0 0
        %729 = vmatpush1.bf16.msra.mxu0 0
        %730 = vmatprep.subr.bf16.mxu0 0
        %731 = vmatpush1.bf16.msra.mxu0 0
        %732 = vmatprep.subr.bf16.mxu0 0
        %733 = vmatpush1.bf16.msra.mxu0 0
        %734 = vmatprep.subr.bf16.mxu0 0
        %735 = vmatpush1.bf16.msra.mxu0 0
        %736 = vmatprep.subr.bf16.mxu0 0
        %737 = vmatpush1.bf16.msra.mxu0 %v720
        %738 = vmatprep.subr.bf16.mxu0 0
        %739 = vmatpush2.bf16.msra.mxu0 0
        %740 = vmatprep.subr.bf16.mxu0 0
        %741 = vmatpush2.bf16.msra.mxu0 0
        %742 = vmatprep.subr.bf16.mxu0 0
        %743 = vmatpush2.bf16.msra.mxu0 0
        %744 = vmatprep.subr.bf16.mxu0 0
        %745 = vmatpush2.bf16.msra.mxu0 0
        %746 = vmatprep.subr.bf16.mxu0 0
        %747 = vmatpush2.bf16.msra.mxu0 0
        %748 = vmatprep.subr.bf16.mxu0 0
        %749 = vmatpush2.bf16.msra.mxu0 0
        %750 = vmatprep.subr.bf16.mxu0 0
        %751 = vmatpush2.bf16.msra.mxu0 0
        %752 = vmatprep.subr.bf16.mxu0 0
        %753 = vmatpush2.bf16.msra.mxu0 0
        %754 = vmatprep.mubr.bf16.mxu0 0
        %755 = vmatmul.mubr.bf16.gmra.mxu0 %v717
        %v756 = vpop.f32.mrf.mxu0
        %v757 = vadd.f32 0.0, %v756
        %v758 = vpop.f32.mrf.mxu0
        %v759 = vpop.f32.mrf.mxu0
        %v760 = vpop.f32.mrf.mxu0
        %761 = vdwg.mxu0
        %764 = vrot.lane.b32.xlu0 %v711, 2
        %v765 = vpop.permute.xlu0 %764
        %766 = vrot.lane.b32.xlu0 %v712, 2
        %v767 = vpop.permute.xlu0 %766
        %v768 = vsel %vm652, %v765, %v767
        %v770 = vsel %vm433, %v713, 0
        %v773 = vsel %vm437, %v768, 0
        %775 = vmatprep.subr.bf16.mxu0 0
        %776 = vmatpush1.bf16.msra.mxu0 0
        %777 = vmatprep.subr.bf16.mxu0 0
        %778 = vmatpush1.bf16.msra.mxu0 0
        %779 = vmatprep.subr.bf16.mxu0 0
        %780 = vmatpush1.bf16.msra.mxu0 0
        %781 = vmatprep.subr.bf16.mxu0 0
        %782 = vmatpush1.bf16.msra.mxu0 0
        %783 = vmatprep.subr.bf16.mxu0 0
        %784 = vmatpush1.bf16.msra.mxu0 0
        %785 = vmatprep.subr.bf16.mxu0 0
        %786 = vmatpush1.bf16.msra.mxu0 0
        %787 = vmatprep.subr.bf16.mxu0 0
        %788 = vmatpush1.bf16.msra.mxu0 0
        %789 = vmatprep.subr.bf16.mxu0 0
        %790 = vmatpush1.bf16.msra.mxu0 %v773
        %791 = vmatprep.subr.bf16.mxu0 0
        %792 = vmatpush2.bf16.msra.mxu0 0
        %793 = vmatprep.subr.bf16.mxu0 0
        %794 = vmatpush2.bf16.msra.mxu0 0
        %795 = vmatprep.subr.bf16.mxu0 0
        %796 = vmatpush2.bf16.msra.mxu0 0
        %797 = vmatprep.subr.bf16.mxu0 0
        %798 = vmatpush2.bf16.msra.mxu0 0
        %799 = vmatprep.subr.bf16.mxu0 0
        %800 = vmatpush2.bf16.msra.mxu0 0
        %801 = vmatprep.subr.bf16.mxu0 0
        %802 = vmatpush2.bf16.msra.mxu0 0
        %803 = vmatprep.subr.bf16.mxu0 0
        %804 = vmatpush2.bf16.msra.mxu0 0
        %805 = vmatprep.subr.bf16.mxu0 0
        %806 = vmatpush2.bf16.msra.mxu0 0
        %807 = vmatprep.mubr.bf16.mxu0 0
        %808 = vmatmul.mubr.bf16.gmra.mxu0 %v770
        %v809 = vpop.f32.mrf.mxu0
        %v810 = vadd.f32 %v757, %v809
        %v811 = vpop.f32.mrf.mxu0
        %v812 = vpop.f32.mrf.mxu0
        %v813 = vpop.f32.mrf.mxu0
        %814 = vdwg.mxu0
        %v815 = vld [vmem:[%s7] sm:$0xff]
        %817 = vset.pattern.permute.xlu0 1
        %818 = vperm.xlu0 %817, %v815
        %v819 = vpop.permute.xlu0 %818
        %v821 = vadd.f32 %v810, %v819
        %v822 = vmax.f32 %v821, 0.0
        %v823 = vadd.f32 %v822, %v591
        %v824 = vmax.f32 %v823, 0.0
        %825 = vst.msk [vmem:[%s296] sm:$0xff] %vm424, %v824
        %s826 = sand.u32 %s203, 1
        %s827 = scalar_lea.sflag [#allocation5], %s826
        %s828 = sand.u32 %s203, 1
        %s829 = smul.addr %s828, 8
        %s830 = scalar_lea.vmem [#allocation4], %s829
        // Predicated region
        $region53: #{tpu_custom_call.1} parent=51 // pred_check
          %p831 = pneg %p213
        $region54: #{tpu_custom_call.1} parent=51 // pred_check_branch
          %833 = sbr.rel (%p831) target = $region56
        $region55: #{tpu_custom_call.1} parent=51 // pred_region
          %s835 = ssub.s32 128, 128
          %836 = vsyncadd %s827, %s835
          %s837 = smul.addr %s22, 128
          %s838 = scalar_lea.hbm %s8, %s837
          %s840 = sshll.u32 %s830, 4
          %s841 = int_to_ptr.vmem [resolvable:$true] %s840
          %843 = dma.vmem_to_hbm [thread:$0]  %s841, 128, %s838, %s827
        $region56: #{tpu_custom_call.1} parent=51 // pred_fallthru
          _
      $region52: #{tpu_custom_call.1} parent=5 // pred_fallthru
        _
      %p844 = scmp.le.s32.totalorder 2, %s17
      // Predicated region
      $region57: #{tpu_custom_call.1} parent=5 // pred_check
        %p845 = pneg %p844
      $region58: #{tpu_custom_call.1} parent=5 // pred_check_branch
        %847 = sbr.rel (%p845) target = $region60
      $region59: #{tpu_custom_call.1} parent=5 // pred_region
        %s848 = ssub.s32 %s17, 2
        // Predicated region
        $region61: #{tpu_custom_call.1} parent=59 // pred_check
          %p849 = pneg %p219
        $region62: #{tpu_custom_call.1} parent=59 // pred_check_branch
          %851 = sbr.rel (%p849) target = $region64
        $region63: #{tpu_custom_call.1} parent=59 // pred_region
          %s852 = sand.u32 %s204, 1
          %s853 = scalar_lea.sflag [#allocation5], %s852
          %s854 = sand.u32 %s204, 1
          %s855 = smul.addr %s854, 8
          %s856 = scalar_lea.vmem [#allocation4], %s855
          %857 = dma.done %s853, 128
        $region64: #{tpu_custom_call.1} parent=59 // pred_fallthru
          _
      $region60: #{tpu_custom_call.1} parent=5 // pred_fallthru
        _
    $region6: #{tpu_custom_call.1} parent=1 // loop_footer
      %s21 = sadd.s32 1, %s17
    $region7: #{tpu_custom_call.1} parent=1 // loop_footer_branch
      %16 = sbr.rel target = $region3
    $region8: #{tpu_custom_call.1} parent=1 // loop_exit
      _
    %858 = vsyncpa [#allocation5], 1
    %s859 = scalar_lea.sflag [#allocation5], 1
    %860 = vsyncpa %s859, 1

</llo_original>
